<compile_context>
chip_gen: v7x
topology: tpu7x:2x2x1
jax: 0.10.0
libtpu: 0.0.40
codegen_flags: <defaults>
</compile_context>

<pallas_src>
import functools
import math

import jax
import jax.numpy as jnp
from jax.experimental import pallas as pl
from jax.experimental.pallas import tpu as pltpu

D_IN = 128           # feature dim
D_HID = 128 * 4      # fc1 output dim
BN_EPS = 1e-5


def _gelu_tanh(x):
    # 0.5 * x * (1 + tanh(sqrt(2/pi) * (x + 0.044715 * x^3)))  -- matches the PyTorch spec's gelu()
    c = math.sqrt(2.0 / math.pi)
    x2 = x * x
    t = jnp.tanh(c * x * (1.0 + 0.044715 * x2))
    return 0.5 * x * (1.0 + t)


def _round_up(n, m):
    return ((n + m - 1) // m) * m


def _default_gelu_dtype():
    # bf16 VPU/EUP exists on v6e/v7x; keep the GELU epilogue in f32 on older chips.
    try:
        kind = jax.devices()[0].device_kind.lower()
    except Exception:
        kind = ""
    if any(tag in kind for tag in ("v2", "v3", "v4", "v5")):
        return jnp.float32
    return jnp.bfloat16


def _choose_tile(n, tile_n):
    tile_n = max(8, (tile_n // 8) * 8)
    if n < 8:
        return n                                   # single full-extent block (no sublane padding needed)
    tn = min(tile_n, (n // 8) * 8)
    # Prefer >= 2 grid steps so v7x's two TensorCores both get work ("parallel" grid axis).
    if pl.cdiv(n, tn) < 2 and n >= 16:
        tn = max(8, _round_up(pl.cdiv(n, 2), 8))
    return tn


def classifier_kernel(x_ref, w1_ref, b1_ref, w2_ref, b2_ref, o_ref, *, gelu_dtype):
    x = x_ref[...]                                                        # (TN, 128) residual
    # --- fc1 (BatchNorm folded into w1/b1); bf16 operands, f32 MXU accumulation ---
    h1 = jnp.dot(x.astype(jnp.bfloat16), w1_ref[...],
                 preferred_element_type=jnp.float32)                      # (TN, 512) f32
    # --- bias + tanh-GELU epilogue in gelu_dtype (bf16 on v6e/v7x, f32 on v5e) ---
    h1 = _gelu_tanh(h1.astype(gelu_dtype) + b1_ref[...])
    # --- dropout (eval: identity) ---
    # --- fc2 (0.3 residual scale folded into w2/b2); bf16 operands, f32 accumulation ---
    h2 = jnp.dot(h1.astype(jnp.bfloat16), w2_ref[...],
                 preferred_element_type=jnp.float32) + b2_ref[...]        # (TN, 128) f32
    # --- dropout (eval: identity), residual add (scale already folded) ---
    o_ref[...] = (x.astype(jnp.float32) + h2).astype(o_ref.dtype)


def classifier_forward(x, params, *, tile_n=2048, gelu_dtype=None):
    N, D = x.shape
    assert D == D_IN
    gamma, beta, mean, var, w1, b1, w2, b2 = params

    if gelu_dtype is None:
        gelu_dtype = _default_gelu_dtype()

    # ---- fold eval-mode BatchNorm1d into fc1, and the 0.3 residual scale into fc2 ----
    inv_std = jax.lax.rsqrt(var + BN_EPS)                  # (1, D_IN)
    scale = gamma * inv_std                                # (1, D_IN)
    shift = beta - mean * scale                            # (1, D_IN)
    w1f = (scale[0][:, None] * w1).astype(jnp.bfloat16)    # (D_IN, D_HID)
    b1f = (b1 + shift @ w1).astype(gelu_dtype)             # (1, D_HID)
    w2b = (0.3 * w2).astype(jnp.bfloat16)                  # (D_HID, D_IN), residual scale folded
    b2f = (0.3 * b2).astype(jnp.float32)                   # (1, D_IN)

    # ---- batch tiling: no padding / slicing; Pallas clips the partial final block ----
    tn = _choose_tile(N, tile_n)
    grid = (pl.cdiv(N, tn),)

    # VMEM budget: double-buffered x/out blocks + h1 intermediates (f32 + bf16 copy) + weights,
    # with 2x headroom; cap at 48 MiB so it stays under v7x's 64 MiB per-TC VMEM.
    x_bytes = tn * D_IN * x.dtype.itemsize
    h1_bytes = tn * D_HID * (4 + 2)
    w_bytes = (D_IN * D_HID + D_HID * D_IN) * 2
    vmem_limit = int(min(48 * 1024 * 1024,
                         max(8 * 1024 * 1024, 2 * (4 * x_bytes + h1_bytes + 2 * w_bytes))))

    kernel = functools.partial(classifier_kernel, gelu_dtype=gelu_dtype)

    out = pl.pallas_call(
        kernel,
        out_shape=jax.ShapeDtypeStruct((N, D_IN), x.dtype),
        grid_spec=pltpu.PrefetchScalarGridSpec(
            num_scalar_prefetch=0,
            grid=grid,
            in_specs=[
                pl.BlockSpec((tn, D_IN), lambda i: (i, 0)),      # x (tiled over batch)
                pl.BlockSpec((D_IN, D_HID), lambda i: (0, 0)),   # fc1 weight (BN-folded, bf16)
                pl.BlockSpec((1, D_HID), lambda i: (0, 0)),      # fc1 bias (BN-folded, gelu dtype)
                pl.BlockSpec((D_HID, D_IN), lambda i: (0, 0)),   # fc2 weight (0.3-folded, bf16)
                pl.BlockSpec((1, D_IN), lambda i: (0, 0)),       # fc2 bias (0.3-folded)
            ],
            out_specs=pl.BlockSpec((tn, D_IN), lambda i: (i, 0)),
        ),
        compiler_params=pltpu.CompilerParams(
            dimension_semantics=("parallel",),
            vmem_limit_bytes=vmem_limit,
        ),
    )(x, w1f, b1f, w2b, b2f)

    return out


def init_params(key):
    # Deterministic init mimicking nn.Linear default (uniform(-1/sqrt(fan_in), 1/sqrt(fan_in)))
    k1, k2, k3, k4, k5, k6 = jax.random.split(key, 6)
    lim1 = 1.0 / math.sqrt(D_IN)
    lim2 = 1.0 / math.sqrt(D_HID)
    w1 = jax.random.uniform(k1, (D_IN, D_HID), jnp.float32, -lim1, lim1)   # fc1.weight.T
    b1 = jax.random.uniform(k2, (1, D_HID), jnp.float32, -lim1, lim1)
    w2 = jax.random.uniform(k3, (D_HID, D_IN), jnp.float32, -lim2, lim2)   # fc2.weight.T
    b2 = jax.random.uniform(k4, (1, D_IN), jnp.float32, -lim2, lim2)
    # BatchNorm1d params: weight=1, bias=0; perturb running stats to exercise the math
    gamma = jnp.ones((1, D_IN), jnp.float32)
    beta = jnp.zeros((1, D_IN), jnp.float32)
    mean = 0.1 * jax.random.normal(k5, (1, D_IN), jnp.float32)
    var = 1.0 + 0.05 * jnp.abs(jax.random.normal(k6, (1, D_IN), jnp.float32))
    return gamma, beta, mean, var, w1, b1, w2, b2


def reference_forward(x, params):
    gamma, beta, mean, var, w1, b1, w2, b2 = params
    h = (x - mean) * jax.lax.rsqrt(var + BN_EPS) * gamma + beta
    h1 = _gelu_tanh(h @ w1 + b1)
    h2 = h1 @ w2 + b2
    return x + 0.3 * h2


if __name__ == "__main__":
    key = jax.random.PRNGKey(0)
    kx, kp = jax.random.split(key)
    # Small shapes: N=20 rows of 128 features.
    N = 20
    x = jax.random.normal(kx, (N, D_IN), jnp.float32)
    params = init_params(kp)
    ref = reference_forward(x, params)

    # tile_n=8 exercises the batch grid (3 steps) + the clipped partial final block (rows 16-19).
    fwd_small_tile = jax.jit(functools.partial(classifier_forward, tile_n=8))
    out = jax.block_until_ready(fwd_small_tile(x, params))
    assert out.shape == (N, D_IN)
    err = float(jnp.max(jnp.abs(out - ref)))
    # bf16 matmul operands / bf16 GELU epilogue (f32 accumulation) vs full-f32 reference
    assert err < 2e-2, err

    # Default tile path: clamps to a multiple of 8 <= N and splits into >= 2 grid steps.
    fwd_default = jax.jit(classifier_forward)
    out2 = jax.block_until_ready(fwd_default(x, params))
    err2 = float(jnp.max(jnp.abs(out2 - ref)))
    assert err2 < 2e-2, err2

    print("KERNEL_OK")
</pallas_src>

<mosaic_0001>
module attributes {stable_mosaic.version = 11 : i64} {
  func.func @classifier_kernel(%arg0: i32, %arg1: memref<8x128xf32, #tpu.memory_space<vmem>>, %arg2: memref<128x512xbf16, #tpu.memory_space<vmem>>, %arg3: memref<1x512xbf16, #tpu.memory_space<vmem>>, %arg4: memref<512x128xbf16, #tpu.memory_space<vmem>>, %arg5: memref<1x128xf32, #tpu.memory_space<vmem>>, %arg6: memref<8x128xf32, #tpu.memory_space<vmem>>) attributes {dimension_semantics = [#tpu.dimension_semantics<parallel>], iteration_bounds = array<i64: 3>, scalar_prefetch = 0 : i64, scratch_operands = 0 : i64, tpu.core_type = #tpu.core_type<tc>, window_params = [{transform_indices = @transform_0, window_bounds = array<i64: 8, 128>}, {pipeline_mode = #tpu.pipeline_mode<synchronous>, transform_indices = @transform_1, window_bounds = array<i64: 128, 512>}, {pipeline_mode = #tpu.pipeline_mode<synchronous>, transform_indices = @transform_2, window_bounds = array<i64: 1, 512>}, {pipeline_mode = #tpu.pipeline_mode<synchronous>, transform_indices = @transform_3, window_bounds = array<i64: 512, 128>}, {pipeline_mode = #tpu.pipeline_mode<synchronous>, transform_indices = @transform_4, window_bounds = array<i64: 1, 128>}, {transform_indices = @transform_5, window_bounds = array<i64: 8, 128>}]} {
    %c0 = arith.constant 0 : index
    %c0_0 = arith.constant 0 : index
    %0 = vector.load %arg1[%c0, %c0_0] : memref<8x128xf32, #tpu.memory_space<vmem>>, vector<8x128xf32>
    %1 = arith.truncf %0 : vector<8x128xf32> to vector<8x128xbf16>
    %c0_1 = arith.constant 0 : index
    %c0_2 = arith.constant 0 : index
    %2 = vector.load %arg2[%c0_1, %c0_2] : memref<128x512xbf16, #tpu.memory_space<vmem>>, vector<128x512xbf16>
    %cst = arith.constant dense<0.000000e+00> : vector<8x512xf32>
    %3 = tpu.matmul %1, %2, %cst {dimension_numbers = #tpu.dot_dimension_numbers<[1], [0], [0], [1], [0, 0, 1, 1], [], []>} : vector<8x128xbf16>, vector<128x512xbf16>, vector<8x512xf32> -> vector<8x512xf32>
    %4 = arith.truncf %3 : vector<8x512xf32> to vector<8x512xbf16>
    %c0_3 = arith.constant 0 : index
    %c0_4 = arith.constant 0 : index
    %5 = vector.load %arg3[%c0_3, %c0_4] : memref<1x512xbf16, #tpu.memory_space<vmem>>, vector<1x512xbf16>
    %6 = vector.broadcast %5 : vector<1x512xbf16> to vector<8x512xbf16>
    %7 = arith.addf %4, %6 : vector<8x512xbf16>
    %8 = arith.mulf %7, %7 : vector<8x512xbf16>
    %cst_5 = arith.constant 7.968750e-01 : bf16
    %9 = vector.broadcast %cst_5 : bf16 to vector<8x512xbf16>
    %10 = arith.mulf %9, %7 : vector<8x512xbf16>
    %cst_6 = arith.constant 4.467770e-02 : bf16
    %11 = vector.broadcast %cst_6 : bf16 to vector<8x512xbf16>
    %12 = arith.mulf %11, %8 : vector<8x512xbf16>
    %cst_7 = arith.constant 1.000000e+00 : bf16
    %13 = vector.broadcast %cst_7 : bf16 to vector<8x512xbf16>
    %14 = arith.addf %13, %12 : vector<8x512xbf16>
    %15 = arith.mulf %10, %14 : vector<8x512xbf16>
    %16 = math.tanh %15 : vector<8x512xbf16>
    %cst_8 = arith.constant 5.000000e-01 : bf16
    %17 = vector.broadcast %cst_8 : bf16 to vector<8x512xbf16>
    %18 = arith.mulf %17, %7 : vector<8x512xbf16>
    %cst_9 = arith.constant 1.000000e+00 : bf16
    %19 = vector.broadcast %cst_9 : bf16 to vector<8x512xbf16>
    %20 = arith.addf %19, %16 : vector<8x512xbf16>
    %21 = arith.mulf %18, %20 : vector<8x512xbf16>
    %c0_10 = arith.constant 0 : index
    %c0_11 = arith.constant 0 : index
    %22 = vector.load %arg4[%c0_10, %c0_11] : memref<512x128xbf16, #tpu.memory_space<vmem>>, vector<512x128xbf16>
    %cst_12 = arith.constant dense<0.000000e+00> : vector<8x128xf32>
    %23 = tpu.matmul %21, %22, %cst_12 {dimension_numbers = #tpu.dot_dimension_numbers<[1], [0], [0], [1], [0, 0, 1, 1], [], []>} : vector<8x512xbf16>, vector<512x128xbf16>, vector<8x128xf32> -> vector<8x128xf32>
    %c0_13 = arith.constant 0 : index
    %c0_14 = arith.constant 0 : index
    %24 = vector.load %arg5[%c0_13, %c0_14] : memref<1x128xf32, #tpu.memory_space<vmem>>, vector<1x128xf32>
    %25 = vector.broadcast %24 : vector<1x128xf32> to vector<8x128xf32>
    %26 = arith.addf %23, %25 : vector<8x128xf32>
    %27 = arith.addf %0, %26 : vector<8x128xf32>
    %c0_15 = arith.constant 0 : index
    %c0_16 = arith.constant 0 : index
    %28 = vector.load %arg6[%c0_15, %c0_16] : memref<8x128xf32, #tpu.memory_space<vmem>>, vector<8x128xf32>
    tpu.vector_store %arg6[%c0_15, %c0_16], %27 {strides = array<i32>} : memref<8x128xf32, #tpu.memory_space<vmem>>, vector<8x128xf32>,
    return
  }
  func.func @transform_0(%arg0: i32) -> (i32, i32) {
    %c0_i32 = arith.constant 0 : i32
    %c0_i32_0 = arith.constant 0 : i32
    return %arg0, %c0_i32 : i32, i32
  }
  func.func @transform_1(%arg0: i32) -> (i32, i32) {
    %c0_i32 = arith.constant 0 : i32
    %c0_i32_0 = arith.constant 0 : i32
    %c0_i32_1 = arith.constant 0 : i32
    return %c0_i32, %c0_i32_0 : i32, i32
  }
  func.func @transform_2(%arg0: i32) -> (i32, i32) {
    %c0_i32 = arith.constant 0 : i32
    %c0_i32_0 = arith.constant 0 : i32
    %c0_i32_1 = arith.constant 0 : i32
    return %c0_i32, %c0_i32_0 : i32, i32
  }
  func.func @transform_3(%arg0: i32) -> (i32, i32) {
    %c0_i32 = arith.constant 0 : i32
    %c0_i32_0 = arith.constant 0 : i32
    %c0_i32_1 = arith.constant 0 : i32
    return %c0_i32, %c0_i32_0 : i32, i32
  }
  func.func @transform_4(%arg0: i32) -> (i32, i32) {
    %c0_i32 = arith.constant 0 : i32
    %c0_i32_0 = arith.constant 0 : i32
    %c0_i32_1 = arith.constant 0 : i32
    return %c0_i32, %c0_i32_0 : i32, i32
  }
  func.func @transform_5(%arg0: i32) -> (i32, i32) {
    %c0_i32 = arith.constant 0 : i32
    %c0_i32_0 = arith.constant 0 : i32
    return %arg0, %c0_i32 : i32, i32
  }
}

</mosaic_0001>

<llo_original>
// kernel: classifier_forward.1
$region0: #{classifier_forward.1}
  #allocation0 [shape = 'u32[]', space=smem, size = 0x4, offset = 0x4, fixed_abs, tag = 'smem constant byte address 0x4 - core index']
  #allocation1 [shape = 'u32[144,128]{1,0:T(1,128)}', space=vmem, size = 0x12000, scoped, tag = 'internal scratch']
  %s0 = inlined_call_operand.vmem [shape: f32[20,128], index: 0, kind: input, shape index: {}]
  %s1 = inlined_call_operand.vmem [shape: bf16[128,512], index: 1, kind: input, shape index: {}]
  %s2 = inlined_call_operand.vmem [shape: bf16[1,512], index: 2, kind: input, shape index: {}]
  %s3 = inlined_call_operand.vmem [shape: bf16[512,128], index: 3, kind: input, shape index: {}]
  %s4 = inlined_call_operand.vmem [shape: f32[1,128], index: 4, kind: input, shape index: {}]
  %s5 = inlined_call_operand.hbm [shape: f32[20,128], index: 5, kind: output, shape index: {}]
  %s6 = sld [smem:[#allocation0]]
  $region53: #{classifier_forward.1} parent=0
    _
  %s8 = ssub.s32 1, %s6
  %s9 = scalar_select 0, %s8, %s6
  $region1: #{classifier_forward.1} parent=0
    #allocation2 [shape = 'u8[8192]{0}', space=vmem, size = 0x2000, scoped, tag = 'output window, operand 0']
    #allocation3 [shape = 's32[2]{0}', space=sflag, size = 0x8, scoped, tag = 'scoped memory for classifier_forward.1']
    %10 = vsyncpa [#allocation3], 0
    %s11 = scalar_lea.sflag [#allocation3], 1
    %12 = vsyncpa %s11, 0
    loop: start=0, step=1, limit=5
    $region2: #{classifier_forward.1} parent=1 // loop_pre_header
      _
    $region3: #{classifier_forward.1} parent=1 // loop_header
      %s14 = sphi 0, %s18
      %p15 = scmp.ge.s32.totalorder %s14, 5
      %s24 = sphi 0, %s26
      %s27 = sphi 0, %s24
      %s28 = sphi 0, %s27
      %s44 = sphi 0, %s28
      %s48 = sphi 0, %s48
      %s50 = sphi 0, %s48
      %s51 = sphi 0, %s50
      %s65 = sphi 0, %s51
      %s69 = sphi 0, %s69
      %s71 = sphi 0, %s69
      %s72 = sphi 0, %s71
      %s86 = sphi 0, %s72
      %s90 = sphi 0, %s90
      %s92 = sphi 0, %s90
      %s93 = sphi 0, %s92
      %s107 = sphi 0, %s93
      %s111 = sphi 0, %s111
      %s113 = sphi 0, %s111
      %s114 = sphi 0, %s113
      %s128 = sphi 0, %s114
      %s134 = sphi 0, %s136
      %s137 = sphi 0, %s134
      %s138 = sphi 0, %s137
      %s154 = sphi 0, %s138
    $region4: #{classifier_forward.1} parent=1 // loop_header_branch
      %17 = sbr.rel (%p15) target = $region8
    $region5: #{classifier_forward.1} parent=1 // loop_body
      %s19 = ssub.s32 %s14, 1
      %s20 = ssub.s32 %s14, 2
      %s21 = sadd.s32 %s14, 1
      %s22 = ssub.s32 %s14, %s21
      %p23 = scmp.eq.s32.totalorder %s22, 0
      %s25 = sadd.s32 %s24, 1
      %s26 = scalar_select %p23, %s24, %s25
      %p29 = pneg %p23
      %p30 = scmp.eq.s32.totalorder %s14, 2
      %p31 = por %p29, %p30
      %p32 = scmp.ne.s32.totalorder %s24, %s27
      %p33 = scmp.eq.s32.totalorder %s14, 0
      %p34 = por %p32, %p33
      %p35 = scmp.ne.s32.totalorder %s24, %s27
      %p36 = scmp.eq.s32.totalorder %s19, 2
      %p37 = por %p35, %p36
      %p38 = scmp.ne.s32.totalorder %s27, %s28
      %p39 = scmp.eq.s32.totalorder %s19, 0
      %p40 = por %p38, %p39
      %p41 = scmp.ne.s32.totalorder %s27, %s28
      %p42 = scmp.eq.s32.totalorder %s20, 2
      %p43 = por %p41, %p42
      %p45 = scmp.ne.s32.totalorder %s28, %s44
      %p46 = scmp.eq.s32.totalorder %s20, 0
      %p47 = por %p45, %p46
      %s49 = sadd.s32 %s48, 1
      %p52 = scmp.eq.s32.totalorder %s14, 2
      %p53 = scmp.ne.s32.totalorder %s48, %s50
      %p54 = scmp.eq.s32.totalorder %s14, 0
      %p55 = por %p53, %p54
      %p56 = scmp.ne.s32.totalorder %s48, %s50
      %p57 = scmp.eq.s32.totalorder %s19, 2
      %p58 = por %p56, %p57
      %p59 = scmp.ne.s32.totalorder %s50, %s51
      %p60 = scmp.eq.s32.totalorder %s19, 0
      %p61 = por %p59, %p60
      %p62 = scmp.ne.s32.totalorder %s50, %s51
      %p63 = scmp.eq.s32.totalorder %s20, 2
      %p64 = por %p62, %p63
      %p66 = scmp.ne.s32.totalorder %s51, %s65
      %p67 = scmp.eq.s32.totalorder %s20, 0
      %p68 = por %p66, %p67
      %s70 = sadd.s32 %s69, 1
      %p73 = scmp.eq.s32.totalorder %s14, 2
      %p74 = scmp.ne.s32.totalorder %s69, %s71
      %p75 = scmp.eq.s32.totalorder %s14, 0
      %p76 = por %p74, %p75
      %p77 = scmp.ne.s32.totalorder %s69, %s71
      %p78 = scmp.eq.s32.totalorder %s19, 2
      %p79 = por %p77, %p78
      %p80 = scmp.ne.s32.totalorder %s71, %s72
      %p81 = scmp.eq.s32.totalorder %s19, 0
      %p82 = por %p80, %p81
      %p83 = scmp.ne.s32.totalorder %s71, %s72
      %p84 = scmp.eq.s32.totalorder %s20, 2
      %p85 = por %p83, %p84
      %p87 = scmp.ne.s32.totalorder %s72, %s86
      %p88 = scmp.eq.s32.totalorder %s20, 0
      %p89 = por %p87, %p88
      %s91 = sadd.s32 %s90, 1
      %p94 = scmp.eq.s32.totalorder %s14, 2
      %p95 = scmp.ne.s32.totalorder %s90, %s92
      %p96 = scmp.eq.s32.totalorder %s14, 0
      %p97 = por %p95, %p96
      %p98 = scmp.ne.s32.totalorder %s90, %s92
      %p99 = scmp.eq.s32.totalorder %s19, 2
      %p100 = por %p98, %p99
      %p101 = scmp.ne.s32.totalorder %s92, %s93
      %p102 = scmp.eq.s32.totalorder %s19, 0
      %p103 = por %p101, %p102
      %p104 = scmp.ne.s32.totalorder %s92, %s93
      %p105 = scmp.eq.s32.totalorder %s20, 2
      %p106 = por %p104, %p105
      %p108 = scmp.ne.s32.totalorder %s93, %s107
      %p109 = scmp.eq.s32.totalorder %s20, 0
      %p110 = por %p108, %p109
      %s112 = sadd.s32 %s111, 1
      %p115 = scmp.eq.s32.totalorder %s14, 2
      %p116 = scmp.ne.s32.totalorder %s111, %s113
      %p117 = scmp.eq.s32.totalorder %s14, 0
      %p118 = por %p116, %p117
      %p119 = scmp.ne.s32.totalorder %s111, %s113
      %p120 = scmp.eq.s32.totalorder %s19, 2
      %p121 = por %p119, %p120
      %p122 = scmp.ne.s32.totalorder %s113, %s114
      %p123 = scmp.eq.s32.totalorder %s19, 0
      %p124 = por %p122, %p123
      %p125 = scmp.ne.s32.totalorder %s113, %s114
      %p126 = scmp.eq.s32.totalorder %s20, 2
      %p127 = por %p125, %p126
      %p129 = scmp.ne.s32.totalorder %s114, %s128
      %p130 = scmp.eq.s32.totalorder %s20, 0
      %p131 = por %p129, %p130
      %s132 = ssub.s32 %s14, %s21
      %p133 = scmp.eq.s32.totalorder %s132, 0
      %s135 = sadd.s32 %s134, 1
      %s136 = scalar_select %p133, %s134, %s135
      %p139 = pneg %p133
      %p140 = scmp.eq.s32.totalorder %s14, 2
      %p141 = por %p139, %p140
      %p142 = scmp.ne.s32.totalorder %s134, %s137
      %p143 = scmp.eq.s32.totalorder %s14, 0
      %p144 = por %p142, %p143
      %p145 = scmp.ne.s32.totalorder %s134, %s137
      %p146 = scmp.eq.s32.totalorder %s19, 2
      %p147 = por %p145, %p146
      %p148 = scmp.ne.s32.totalorder %s137, %s138
      %p149 = scmp.eq.s32.totalorder %s19, 0
      %p150 = por %p148, %p149
      %p151 = scmp.ne.s32.totalorder %s137, %s138
      %p152 = scmp.eq.s32.totalorder %s20, 2
      %p153 = por %p151, %p152
      %p155 = scmp.ne.s32.totalorder %s138, %s154
      %p156 = scmp.eq.s32.totalorder %s20, 0
      %p157 = por %p155, %p156
      %p158 = scmp.le.s32.totalorder 1, %s14
      %p159 = scmp.lt.s32.totalorder %s14, 4
      %p160 = pnand %p158, %p159
      %p161 = pneg %p160
      // Predicated region
      $region9: #{classifier_forward.1} parent=5 // pred_check
        _
      $region10: #{classifier_forward.1} parent=5 // pred_check_branch
        %163 = sbr.rel (%p160) target = $region12
      $region11: #{classifier_forward.1} parent=5 // pred_region
        %s164 = ssub.s32 %s14, 1
        // Predicated region
        $region13: #{classifier_forward.1} parent=11 // pred_check
          %p165 = pneg %p61
        $region14: #{classifier_forward.1} parent=11 // pred_check_branch
          %167 = sbr.rel (%p165) target = $region16
        $region15: #{classifier_forward.1} parent=11 // pred_region
          _
        $region16: #{classifier_forward.1} parent=11 // pred_fallthru
          _
        // Predicated region
        $region17: #{classifier_forward.1} parent=11 // pred_check
          %p168 = pneg %p82
        $region18: #{classifier_forward.1} parent=11 // pred_check_branch
          %170 = sbr.rel (%p168) target = $region20
        $region19: #{classifier_forward.1} parent=11 // pred_region
          _
        $region20: #{classifier_forward.1} parent=11 // pred_fallthru
          _
        // Predicated region
        $region21: #{classifier_forward.1} parent=11 // pred_check
          %p171 = pneg %p103
        $region22: #{classifier_forward.1} parent=11 // pred_check_branch
          %173 = sbr.rel (%p171) target = $region24
        $region23: #{classifier_forward.1} parent=11 // pred_region
          _
        $region24: #{classifier_forward.1} parent=11 // pred_fallthru
          _
        // Predicated region
        $region25: #{classifier_forward.1} parent=11 // pred_check
          %p174 = pneg %p124
        $region26: #{classifier_forward.1} parent=11 // pred_check_branch
          %176 = sbr.rel (%p174) target = $region28
        $region27: #{classifier_forward.1} parent=11 // pred_region
          _
        $region28: #{classifier_forward.1} parent=11 // pred_fallthru
          _
      $region12: #{classifier_forward.1} parent=5 // pred_fallthru
        _
      %p177 = scmp.lt.s32.totalorder %s14, 3
      // Predicated region
      $region29: #{classifier_forward.1} parent=5 // pred_check
        %p178 = pneg %p177
      $region30: #{classifier_forward.1} parent=5 // pred_check_branch
        %180 = sbr.rel (%p178) target = $region32
      $region31: #{classifier_forward.1} parent=5 // pred_region
        // Predicated region
        $region33: #{classifier_forward.1} parent=31 // pred_check
          %p181 = pneg %p34
        $region34: #{classifier_forward.1} parent=31 // pred_check_branch
          %183 = sbr.rel (%p181) target = $region36
        $region35: #{classifier_forward.1} parent=31 // pred_region
          %p184 = scmp.lt.s32.totalorder %s14, 2
          %s185 = scalar_select %p184, %s14, 2
          %s186 = smul.addr %s185, 8
          %s187 = scalar_lea.vmem %s0, %s186
        $region36: #{classifier_forward.1} parent=31 // pred_fallthru
          _
      $region32: #{classifier_forward.1} parent=5 // pred_fallthru
        _
      %p188 = scmp.le.s32.totalorder 1, %s14
      %p189 = scmp.lt.s32.totalorder %s14, 4
      %p190 = pnand %p188, %p189
      %p191 = pneg %p190
      // Predicated region
      $region37: #{classifier_forward.1} parent=5 // pred_check
        _
      $region38: #{classifier_forward.1} parent=5 // pred_check_branch
        %193 = sbr.rel (%p190) target = $region40
      $region39: #{classifier_forward.1} parent=5 // pred_region
        %s194 = ssub.s32 %s14, 1
        %p195 = scmp.lt.s32.totalorder %s19, 2
        %s196 = scalar_select %p195, %s19, 2
        %s197 = smul.addr %s196, 8
        %s198 = scalar_lea.vmem %s0, %s197
        %p199 = pneg %p40
        %p200 = pneg %p37
        %p201 = pneg %p61
        %p202 = pneg %p58
        %p203 = pneg %p82
        %p204 = pneg %p79
        %p205 = pneg %p103
        %p206 = pneg %p100
        %p207 = pneg %p124
        %p208 = pneg %p121
        %p209 = pneg %p150
        %p210 = pneg %p147
        %s211 = sand.u32 %s137, 1
        %s212 = scalar_lea.sflag [#allocation3], %s211
        %s213 = sand.u32 %s137, 1
        %s214 = smul.addr %s213, 8
        %s215 = scalar_lea.vmem [#allocation2], %s214
        %p216 = scmp.lt.s32.totalorder %s19, 2
        %s217 = scalar_select %p216, %s19, 2
        %s218 = smul.addr %s217, 8
        %s219 = scalar_lea.vmem %s0, %s218
        %v225 = vld [vmem:[%s219] sm:$0xff]
        %v226 = vpack.c.bf16 %v225, %v225
        %v227 = vld [vmem:[%s1] sm:$0xff]
        %v228 = vld [vmem:[%s1 + $0x8] sm:$0xff]
        %v229 = vld [vmem:[%s1 + $0x10] sm:$0xff]
        %v230 = vld [vmem:[%s1 + $0x18] sm:$0xff]
        %v231 = vld [vmem:[%s1 + $0x20] sm:$0xff]
        %v232 = vld [vmem:[%s1 + $0x28] sm:$0xff]
        %v233 = vld [vmem:[%s1 + $0x30] sm:$0xff]
        %v234 = vld [vmem:[%s1 + $0x38] sm:$0xff]
        %v235 = vld [vmem:[%s1 + $0x40] sm:$0xff]
        %v236 = vld [vmem:[%s1 + $0x48] sm:$0xff]
        %v237 = vld [vmem:[%s1 + $0x50] sm:$0xff]
        %v238 = vld [vmem:[%s1 + $0x58] sm:$0xff]
        %v239 = vld [vmem:[%s1 + $0x60] sm:$0xff]
        %v240 = vld [vmem:[%s1 + $0x68] sm:$0xff]
        %v241 = vld [vmem:[%s1 + $0x70] sm:$0xff]
        %v242 = vld [vmem:[%s1 + $0x78] sm:$0xff]
        %v243 = vld [vmem:[%s1 + $0x80] sm:$0xff]
        %v244 = vld [vmem:[%s1 + $0x88] sm:$0xff]
        %v245 = vld [vmem:[%s1 + $0x90] sm:$0xff]
        %v246 = vld [vmem:[%s1 + $0x98] sm:$0xff]
        %v247 = vld [vmem:[%s1 + $0xa0] sm:$0xff]
        %v248 = vld [vmem:[%s1 + $0xa8] sm:$0xff]
        %v249 = vld [vmem:[%s1 + $0xb0] sm:$0xff]
        %v250 = vld [vmem:[%s1 + $0xb8] sm:$0xff]
        %v251 = vld [vmem:[%s1 + $0xc0] sm:$0xff]
        %v252 = vld [vmem:[%s1 + $0xc8] sm:$0xff]
        %v253 = vld [vmem:[%s1 + $0xd0] sm:$0xff]
        %v254 = vld [vmem:[%s1 + $0xd8] sm:$0xff]
        %v255 = vld [vmem:[%s1 + $0xe0] sm:$0xff]
        %v256 = vld [vmem:[%s1 + $0xe8] sm:$0xff]
        %v257 = vld [vmem:[%s1 + $0xf0] sm:$0xff]
        %v258 = vld [vmem:[%s1 + $0xf8] sm:$0xff]
        %v291 = vunpack.c.l.b16 %v227
        %v292 = vunpack.c.h.b16 %v227
        %v293 = vunpack.c.l.b16 %v228
        %v294 = vunpack.c.h.b16 %v228
        %v295 = vunpack.c.l.b16 %v229
        %v296 = vunpack.c.h.b16 %v229
        %v297 = vunpack.c.l.b16 %v230
        %v298 = vunpack.c.h.b16 %v230
        %v299 = vunpack.c.l.b16 %v231
        %v300 = vunpack.c.h.b16 %v231
        %v301 = vunpack.c.l.b16 %v232
        %v302 = vunpack.c.h.b16 %v232
        %v303 = vunpack.c.l.b16 %v233
        %v304 = vunpack.c.h.b16 %v233
        %v305 = vunpack.c.l.b16 %v234
        %v306 = vunpack.c.h.b16 %v234
        %v307 = vunpack.c.l.b16 %v235
        %v308 = vunpack.c.h.b16 %v235
        %v309 = vunpack.c.l.b16 %v236
        %v310 = vunpack.c.h.b16 %v236
        %v311 = vunpack.c.l.b16 %v237
        %v312 = vunpack.c.h.b16 %v237
        %v313 = vunpack.c.l.b16 %v238
        %v314 = vunpack.c.h.b16 %v238
        %v315 = vunpack.c.l.b16 %v239
        %v316 = vunpack.c.h.b16 %v239
        %v317 = vunpack.c.l.b16 %v240
        %v318 = vunpack.c.h.b16 %v240
        %v319 = vunpack.c.l.b16 %v241
        %v320 = vunpack.c.h.b16 %v241
        %v321 = vunpack.c.l.b16 %v242
        %v322 = vunpack.c.h.b16 %v242
        %v323 = vunpack.c.l.b16 %v243
        %v324 = vunpack.c.h.b16 %v243
        %v325 = vunpack.c.l.b16 %v244
        %v326 = vunpack.c.h.b16 %v244
        %v327 = vunpack.c.l.b16 %v245
        %v328 = vunpack.c.h.b16 %v245
        %v329 = vunpack.c.l.b16 %v246
        %v330 = vunpack.c.h.b16 %v246
        %v331 = vunpack.c.l.b16 %v247
        %v332 = vunpack.c.h.b16 %v247
        %v333 = vunpack.c.l.b16 %v248
        %v334 = vunpack.c.h.b16 %v248
        %v335 = vunpack.c.l.b16 %v249
        %v336 = vunpack.c.h.b16 %v249
        %v337 = vunpack.c.l.b16 %v250
        %v338 = vunpack.c.h.b16 %v250
        %v339 = vunpack.c.l.b16 %v251
        %v340 = vunpack.c.h.b16 %v251
        %v341 = vunpack.c.l.b16 %v252
        %v342 = vunpack.c.h.b16 %v252
        %v343 = vunpack.c.l.b16 %v253
        %v344 = vunpack.c.h.b16 %v253
        %v345 = vunpack.c.l.b16 %v254
        %v346 = vunpack.c.h.b16 %v254
        %v347 = vunpack.c.l.b16 %v255
        %v348 = vunpack.c.h.b16 %v255
        %v349 = vunpack.c.l.b16 %v256
        %v350 = vunpack.c.h.b16 %v256
        %v351 = vunpack.c.l.b16 %v257
        %v352 = vunpack.c.h.b16 %v257
        %v353 = vunpack.c.l.b16 %v258
        %v354 = vunpack.c.h.b16 %v258
        %v355 = vpack.c.b16 %v295, %v291
        %v356 = vpack.c.b16 %v296, %v292
        %v357 = vpack.c.b16 %v297, %v293
        %v358 = vpack.c.b16 %v298, %v294
        %v359 = vpack.c.b16 %v303, %v299
        %v360 = vpack.c.b16 %v304, %v300
        %v361 = vpack.c.b16 %v305, %v301
        %v362 = vpack.c.b16 %v306, %v302
        %v363 = vpack.c.b16 %v311, %v307
        %v364 = vpack.c.b16 %v312, %v308
        %v365 = vpack.c.b16 %v313, %v309
        %v366 = vpack.c.b16 %v314, %v310
        %v367 = vpack.c.b16 %v319, %v315
        %v368 = vpack.c.b16 %v320, %v316
        %v369 = vpack.c.b16 %v321, %v317
        %v370 = vpack.c.b16 %v322, %v318
        %v371 = vpack.c.b16 %v327, %v323
        %v372 = vpack.c.b16 %v328, %v324
        %v373 = vpack.c.b16 %v329, %v325
        %v374 = vpack.c.b16 %v330, %v326
        %v375 = vpack.c.b16 %v335, %v331
        %v376 = vpack.c.b16 %v336, %v332
        %v377 = vpack.c.b16 %v337, %v333
        %v378 = vpack.c.b16 %v338, %v334
        %v379 = vpack.c.b16 %v343, %v339
        %v380 = vpack.c.b16 %v344, %v340
        %v381 = vpack.c.b16 %v345, %v341
        %v382 = vpack.c.b16 %v346, %v342
        %v383 = vpack.c.b16 %v351, %v347
        %v384 = vpack.c.b16 %v352, %v348
        %v385 = vpack.c.b16 %v353, %v349
        %v386 = vpack.c.b16 %v354, %v350
        %419 = vmatprep.subr.bf16.mxu0 %v356
        %420 = vmatpush1.bf16.msra.mxu0 %v355
        %421 = vmatprep.subr.bf16.mxu0 %v360
        %422 = vmatpush1.bf16.msra.mxu0 %v359
        %423 = vmatprep.subr.bf16.mxu0 %v364
        %424 = vmatpush1.bf16.msra.mxu0 %v363
        %425 = vmatprep.subr.bf16.mxu0 %v368
        %426 = vmatpush1.bf16.msra.mxu0 %v367
        %427 = vmatprep.subr.bf16.mxu0 %v372
        %428 = vmatpush1.bf16.msra.mxu0 %v371
        %429 = vmatprep.subr.bf16.mxu0 %v376
        %430 = vmatpush1.bf16.msra.mxu0 %v375
        %431 = vmatprep.subr.bf16.mxu0 %v380
        %432 = vmatpush1.bf16.msra.mxu0 %v379
        %433 = vmatprep.subr.bf16.mxu0 %v384
        %434 = vmatpush1.bf16.msra.mxu0 %v383
        %435 = vmatprep.subr.bf16.mxu0 0
        %436 = vmatpush1.bf16.msra.mxu0 0
        %437 = vmatprep.subr.bf16.mxu0 0
        %438 = vmatpush1.bf16.msra.mxu0 0
        %439 = vmatprep.subr.bf16.mxu0 0
        %440 = vmatpush1.bf16.msra.mxu0 0
        %441 = vmatprep.subr.bf16.mxu0 0
        %442 = vmatpush1.bf16.msra.mxu0 0
        %443 = vmatprep.subr.bf16.mxu0 0
        %444 = vmatpush1.bf16.msra.mxu0 0
        %445 = vmatprep.subr.bf16.mxu0 0
        %446 = vmatpush1.bf16.msra.mxu0 0
        %447 = vmatprep.subr.bf16.mxu0 0
        %448 = vmatpush1.bf16.msra.mxu0 0
        %449 = vmatprep.subr.bf16.mxu0 0
        %450 = vmatpush1.bf16.msra.mxu0 0
        %451 = vmatprep.mubr.bf16.mxu0 0
        %452 = vmatmul.mubr.bf16.gmra.mrb[0].mxu0 %v226
        %v453 = vpop.f32.mrb[0].mxu0
        %v454 = vadd.f32 0.0, %v453
        %v455 = vpop.f32.mrb[0].mxu0
        %v456 = vadd.f32 0.0, %v455
        %v457 = vpop.f32.mrb[0].mxu0
        %v458 = vpop.f32.mrb[0].mxu0
        %459 = vdwg.mxu0
        %460 = vmatprep.subr.bf16.mxu0 %v358
        %461 = vmatpush1.bf16.msra.mxu0 %v357
        %462 = vmatprep.subr.bf16.mxu0 %v362
        %463 = vmatpush1.bf16.msra.mxu0 %v361
        %464 = vmatprep.subr.bf16.mxu0 %v366
        %465 = vmatpush1.bf16.msra.mxu0 %v365
        %466 = vmatprep.subr.bf16.mxu0 %v370
        %467 = vmatpush1.bf16.msra.mxu0 %v369
        %468 = vmatprep.subr.bf16.mxu0 %v374
        %469 = vmatpush1.bf16.msra.mxu0 %v373
        %470 = vmatprep.subr.bf16.mxu0 %v378
        %471 = vmatpush1.bf16.msra.mxu0 %v377
        %472 = vmatprep.subr.bf16.mxu0 %v382
        %473 = vmatpush1.bf16.msra.mxu0 %v381
        %474 = vmatprep.subr.bf16.mxu0 %v386
        %475 = vmatpush1.bf16.msra.mxu0 %v385
        %476 = vmatprep.subr.bf16.mxu0 0
        %477 = vmatpush1.bf16.msra.mxu0 0
        %478 = vmatprep.subr.bf16.mxu0 0
        %479 = vmatpush1.bf16.msra.mxu0 0
        %480 = vmatprep.subr.bf16.mxu0 0
        %481 = vmatpush1.bf16.msra.mxu0 0
        %482 = vmatprep.subr.bf16.mxu0 0
        %483 = vmatpush1.bf16.msra.mxu0 0
        %484 = vmatprep.subr.bf16.mxu0 0
        %485 = vmatpush1.bf16.msra.mxu0 0
        %486 = vmatprep.subr.bf16.mxu0 0
        %487 = vmatpush1.bf16.msra.mxu0 0
        %488 = vmatprep.subr.bf16.mxu0 0
        %489 = vmatpush1.bf16.msra.mxu0 0
        %490 = vmatprep.subr.bf16.mxu0 0
        %491 = vmatpush1.bf16.msra.mxu0 0
        %492 = vmatprep.mubr.bf16.mxu0 0
        %493 = vmatmul.mubr.bf16.gmra.mrb[0].mxu0 %v226
        %v494 = vpop.f32.mrb[0].mxu0
        %v495 = vadd.f32 0.0, %v494
        %v496 = vpop.f32.mrb[0].mxu0
        %v497 = vadd.f32 0.0, %v496
        %v498 = vpop.f32.mrb[0].mxu0
        %v499 = vpop.f32.mrb[0].mxu0
        %500 = vdwg.mxu0
        %v501 = vpack.c.bf16 %v454, %v454
        %v502 = vpack.c.bf16 %v456, %v456
        %v503 = vpack.c.bf16 %v495, %v495
        %v504 = vpack.c.bf16 %v497, %v497
        %v505 = vld [vmem:[%s2] sm:$0xf]
        %v508 = vunpack.c.l.s4 1966171168
        %v509 = vunpack.c.0.s8 %v508
        %v510 = vlaneseq
        %v511 = vshrl.u32 %v510, 7
        %v512 = vsub.s32 %v509, %v511
        %v513 = vrot.slane %v505, %v512
        %v514 = vcombine.high %v513, %v513
        %v516 = vunpack.c.l.s4 1966171168
        %v517 = vunpack.c.0.s8 %v516
        %v518 = vlaneseq
        %v519 = vshrl.u32 %v518, 7
        %v520 = vsub.s32 %v517, %v519
        %v521 = vrot.slane %v513, %v520
        %v523 = vunpack.c.l.s4 1966171168
        %v524 = vunpack.c.0.s8 %v523
        %v525 = vlaneseq
        %v526 = vshrl.u32 %v525, 7
        %v527 = vsub.s32 %v524, %v526
        %v528 = vrot.slane %v514, %v527
        %v529 = vcombine.high %v521, %v521
        %v530 = vcombine.high %v528, %v528
        %v532 = vpack.i.b16 %v521, %v521
        %v534 = vlaneseq
        %v535 = vshrl.u32 %v534, 7
        %v536 = vsub.s32 0, %v535
        %v537 = vrot.slane %v532, %v536
        %v539 = vpack.i.b16 %v528, %v528
        %v541 = vlaneseq
        %v542 = vshrl.u32 %v541, 7
        %v543 = vsub.s32 0, %v542
        %v544 = vrot.slane %v539, %v543
        %v546 = vpack.i.b16 %v529, %v529
        %v548 = vlaneseq
        %v549 = vshrl.u32 %v548, 7
        %v550 = vsub.s32 0, %v549
        %v551 = vrot.slane %v546, %v550
        %v553 = vpack.i.b16 %v530, %v530
        %v555 = vlaneseq
        %v556 = vshrl.u32 %v555, 7
        %v557 = vsub.s32 0, %v556
        %v558 = vrot.slane %v553, %v557
        %v559 = vadd.bf16 %v501, %v537
        %v560 = vadd.bf16 %v502, %v544
        %v561 = vadd.bf16 %v503, %v551
        %v562 = vadd.bf16 %v504, %v558
        %v563 = vmul.bf16 %v559, %v559
        %v564 = vmul.bf16 %v560, %v560
        %v565 = vmul.bf16 %v561, %v561
        %v566 = vmul.bf16 %v562, %v562
        %v567 = vmul.bf16 %v559, 1061961548
        %v568 = vmul.bf16 %v560, 1061961548
        %v569 = vmul.bf16 %v561, 1061961548
        %v570 = vmul.bf16 %v562, 1061961548
        %v571 = vmul.bf16 %v563, 1027030327
        %v572 = vmul.bf16 %v564, 1027030327
        %v573 = vmul.bf16 %v565, 1027030327
        %v574 = vmul.bf16 %v566, 1027030327
        %v575 = vadd.bf16 %v571, 1065369472
        %v576 = vadd.bf16 %v572, 1065369472
        %v577 = vadd.bf16 %v573, 1065369472
        %v578 = vadd.bf16 %v574, 1065369472
        %v579 = vmul.bf16 %v567, %v575
        %v580 = vmul.bf16 %v568, %v576
        %v581 = vmul.bf16 %v569, %v577
        %v582 = vmul.bf16 %v570, %v578
        %v583 = vtanh.bf16.pop %v579
        %v584 = vtanh.bf16.pop %v580
        %v585 = vtanh.bf16.pop %v581
        %v586 = vtanh.bf16.pop %v582
        %v587 = vmul.bf16 %v559, 1056980736
        %v588 = vmul.bf16 %v560, 1056980736
        %v589 = vmul.bf16 %v561, 1056980736
        %v590 = vmul.bf16 %v562, 1056980736
        %v591 = vadd.bf16 %v583, 1065369472
        %v592 = vadd.bf16 %v584, 1065369472
        %v593 = vadd.bf16 %v585, 1065369472
        %v594 = vadd.bf16 %v586, 1065369472
        %v595 = vmul.bf16 %v587, %v591
        %v596 = vmul.bf16 %v588, %v592
        %v597 = vmul.bf16 %v589, %v593
        %v598 = vmul.bf16 %v590, %v594
        %v599 = vld [vmem:[%s3] sm:$0xf]
        %v600 = vld [vmem:[%s3 + $0x4] sm:$0xf]
        %v601 = vld [vmem:[%s3 + $0x8] sm:$0xf]
        %v602 = vld [vmem:[%s3 + $0xc] sm:$0xf]
        %v603 = vld [vmem:[%s3 + $0x10] sm:$0xf]
        %v604 = vld [vmem:[%s3 + $0x14] sm:$0xf]
        %v605 = vld [vmem:[%s3 + $0x18] sm:$0xf]
        %v606 = vld [vmem:[%s3 + $0x1c] sm:$0xf]
        %v607 = vld [vmem:[%s3 + $0x20] sm:$0xf]
        %v608 = vld [vmem:[%s3 + $0x24] sm:$0xf]
        %v609 = vld [vmem:[%s3 + $0x28] sm:$0xf]
        %v610 = vld [vmem:[%s3 + $0x2c] sm:$0xf]
        %v611 = vld [vmem:[%s3 + $0x30] sm:$0xf]
        %v612 = vld [vmem:[%s3 + $0x34] sm:$0xf]
        %v613 = vld [vmem:[%s3 + $0x38] sm:$0xf]
        %v614 = vld [vmem:[%s3 + $0x3c] sm:$0xf]
        %v615 = vld [vmem:[%s3 + $0x40] sm:$0xf]
        %v616 = vld [vmem:[%s3 + $0x44] sm:$0xf]
        %v617 = vld [vmem:[%s3 + $0x48] sm:$0xf]
        %v618 = vld [vmem:[%s3 + $0x4c] sm:$0xf]
        %v619 = vld [vmem:[%s3 + $0x50] sm:$0xf]
        %v620 = vld [vmem:[%s3 + $0x54] sm:$0xf]
        %v621 = vld [vmem:[%s3 + $0x58] sm:$0xf]
        %v622 = vld [vmem:[%s3 + $0x5c] sm:$0xf]
        %v623 = vld [vmem:[%s3 + $0x60] sm:$0xf]
        %v624 = vld [vmem:[%s3 + $0x64] sm:$0xf]
        %v625 = vld [vmem:[%s3 + $0x68] sm:$0xf]
        %v626 = vld [vmem:[%s3 + $0x6c] sm:$0xf]
        %v627 = vld [vmem:[%s3 + $0x70] sm:$0xf]
        %v628 = vld [vmem:[%s3 + $0x74] sm:$0xf]
        %v629 = vld [vmem:[%s3 + $0x78] sm:$0xf]
        %v630 = vld [vmem:[%s3 + $0x7c] sm:$0xf]
        %v631 = vld [vmem:[%s3 + $0x80] sm:$0xf]
        %v632 = vld [vmem:[%s3 + $0x84] sm:$0xf]
        %v633 = vld [vmem:[%s3 + $0x88] sm:$0xf]
        %v634 = vld [vmem:[%s3 + $0x8c] sm:$0xf]
        %v635 = vld [vmem:[%s3 + $0x90] sm:$0xf]
        %v636 = vld [vmem:[%s3 + $0x94] sm:$0xf]
        %v637 = vld [vmem:[%s3 + $0x98] sm:$0xf]
        %v638 = vld [vmem:[%s3 + $0x9c] sm:$0xf]
        %v639 = vld [vmem:[%s3 + $0xa0] sm:$0xf]
        %v640 = vld [vmem:[%s3 + $0xa4] sm:$0xf]
        %v641 = vld [vmem:[%s3 + $0xa8] sm:$0xf]
        %v642 = vld [vmem:[%s3 + $0xac] sm:$0xf]
        %v643 = vld [vmem:[%s3 + $0xb0] sm:$0xf]
        %v644 = vld [vmem:[%s3 + $0xb4] sm:$0xf]
        %v645 = vld [vmem:[%s3 + $0xb8] sm:$0xf]
        %v646 = vld [vmem:[%s3 + $0xbc] sm:$0xf]
        %v647 = vld [vmem:[%s3 + $0xc0] sm:$0xf]
        %v648 = vld [vmem:[%s3 + $0xc4] sm:$0xf]
        %v649 = vld [vmem:[%s3 + $0xc8] sm:$0xf]
        %v650 = vld [vmem:[%s3 + $0xcc] sm:$0xf]
        %v651 = vld [vmem:[%s3 + $0xd0] sm:$0xf]
        %v652 = vld [vmem:[%s3 + $0xd4] sm:$0xf]
        %v653 = vld [vmem:[%s3 + $0xd8] sm:$0xf]
        %v654 = vld [vmem:[%s3 + $0xdc] sm:$0xf]
        %v655 = vld [vmem:[%s3 + $0xe0] sm:$0xf]
        %v656 = vld [vmem:[%s3 + $0xe4] sm:$0xf]
        %v657 = vld [vmem:[%s3 + $0xe8] sm:$0xf]
        %v658 = vld [vmem:[%s3 + $0xec] sm:$0xf]
        %v659 = vld [vmem:[%s3 + $0xf0] sm:$0xf]
        %v660 = vld [vmem:[%s3 + $0xf4] sm:$0xf]
        %v661 = vld [vmem:[%s3 + $0xf8] sm:$0xf]
        %v662 = vld [vmem:[%s3 + $0xfc] sm:$0xf]
        %v663 = vld [vmem:[%s4] sm:$0x1]
        %v665 = vlaneseq
        %v666 = vshrl.u32 %v665, 7
        %v667 = vsub.s32 0, %v666
        %v668 = vrot.slane %v663, %v667
        %v734 = vunpack.c.l.b16 %v599
        %v735 = vunpack.c.l.b16 %v600
        %v736 = vunpack.c.l.b16 %v601
        %v737 = vunpack.c.l.b16 %v602
        %v738 = vunpack.c.l.b16 %v603
        %v739 = vunpack.c.l.b16 %v604
        %v740 = vunpack.c.l.b16 %v605
        %v741 = vunpack.c.l.b16 %v606
        %v742 = vunpack.c.l.b16 %v607
        %v743 = vunpack.c.l.b16 %v608
        %v744 = vunpack.c.l.b16 %v609
        %v745 = vunpack.c.l.b16 %v610
        %v746 = vunpack.c.l.b16 %v611
        %v747 = vunpack.c.l.b16 %v612
        %v748 = vunpack.c.l.b16 %v613
        %v749 = vunpack.c.l.b16 %v614
        %v750 = vunpack.c.l.b16 %v615
        %v751 = vunpack.c.l.b16 %v616
        %v752 = vunpack.c.l.b16 %v617
        %v753 = vunpack.c.l.b16 %v618
        %v754 = vunpack.c.l.b16 %v619
        %v755 = vunpack.c.l.b16 %v620
        %v756 = vunpack.c.l.b16 %v621
        %v757 = vunpack.c.l.b16 %v622
        %v758 = vunpack.c.l.b16 %v623
        %v759 = vunpack.c.l.b16 %v624
        %v760 = vunpack.c.l.b16 %v625
        %v761 = vunpack.c.l.b16 %v626
        %v762 = vunpack.c.l.b16 %v627
        %v763 = vunpack.c.l.b16 %v628
        %v764 = vunpack.c.l.b16 %v629
        %v765 = vunpack.c.l.b16 %v630
        %v766 = vunpack.c.l.b16 %v631
        %v767 = vunpack.c.l.b16 %v632
        %v768 = vunpack.c.l.b16 %v633
        %v769 = vunpack.c.l.b16 %v634
        %v770 = vunpack.c.l.b16 %v635
        %v771 = vunpack.c.l.b16 %v636
        %v772 = vunpack.c.l.b16 %v637
        %v773 = vunpack.c.l.b16 %v638
        %v774 = vunpack.c.l.b16 %v639
        %v775 = vunpack.c.l.b16 %v640
        %v776 = vunpack.c.l.b16 %v641
        %v777 = vunpack.c.l.b16 %v642
        %v778 = vunpack.c.l.b16 %v643
        %v779 = vunpack.c.l.b16 %v644
        %v780 = vunpack.c.l.b16 %v645
        %v781 = vunpack.c.l.b16 %v646
        %v782 = vunpack.c.l.b16 %v647
        %v783 = vunpack.c.l.b16 %v648
        %v784 = vunpack.c.l.b16 %v649
        %v785 = vunpack.c.l.b16 %v650
        %v786 = vunpack.c.l.b16 %v651
        %v787 = vunpack.c.l.b16 %v652
        %v788 = vunpack.c.l.b16 %v653
        %v789 = vunpack.c.l.b16 %v654
        %v790 = vunpack.c.l.b16 %v655
        %v791 = vunpack.c.l.b16 %v656
        %v792 = vunpack.c.l.b16 %v657
        %v793 = vunpack.c.l.b16 %v658
        %v794 = vunpack.c.l.b16 %v659
        %v795 = vunpack.c.l.b16 %v660
        %v796 = vunpack.c.l.b16 %v661
        %v797 = vunpack.c.l.b16 %v662
        %v798 = vpack.c.b16 %v735, %v734
        %v799 = vpack.c.b16 %v737, %v736
        %v800 = vpack.c.b16 %v739, %v738
        %v801 = vpack.c.b16 %v741, %v740
        %v802 = vpack.c.b16 %v743, %v742
        %v803 = vpack.c.b16 %v745, %v744
        %v804 = vpack.c.b16 %v747, %v746
        %v805 = vpack.c.b16 %v749, %v748
        %v806 = vpack.c.b16 %v751, %v750
        %v807 = vpack.c.b16 %v753, %v752
        %v808 = vpack.c.b16 %v755, %v754
        %v809 = vpack.c.b16 %v757, %v756
        %v810 = vpack.c.b16 %v759, %v758
        %v811 = vpack.c.b16 %v761, %v760
        %v812 = vpack.c.b16 %v763, %v762
        %v813 = vpack.c.b16 %v765, %v764
        %v814 = vpack.c.b16 %v767, %v766
        %v815 = vpack.c.b16 %v769, %v768
        %v816 = vpack.c.b16 %v771, %v770
        %v817 = vpack.c.b16 %v773, %v772
        %v818 = vpack.c.b16 %v775, %v774
        %v819 = vpack.c.b16 %v777, %v776
        %v820 = vpack.c.b16 %v779, %v778
        %v821 = vpack.c.b16 %v781, %v780
        %v822 = vpack.c.b16 %v783, %v782
        %v823 = vpack.c.b16 %v785, %v784
        %v824 = vpack.c.b16 %v787, %v786
        %v825 = vpack.c.b16 %v789, %v788
        %v826 = vpack.c.b16 %v791, %v790
        %v827 = vpack.c.b16 %v793, %v792
        %v828 = vpack.c.b16 %v795, %v794
        %v829 = vpack.c.b16 %v797, %v796
        %862 = vmatprep.subr.bf16.mxu0 0
        %863 = vmatpush1.bf16.msra.mxu0 %v798
        %864 = vmatprep.subr.bf16.mxu0 0
        %865 = vmatpush1.bf16.msra.mxu0 %v799
        %866 = vmatprep.subr.bf16.mxu0 0
        %867 = vmatpush1.bf16.msra.mxu0 %v800
        %868 = vmatprep.subr.bf16.mxu0 0
        %869 = vmatpush1.bf16.msra.mxu0 %v801
        %870 = vmatprep.subr.bf16.mxu0 0
        %871 = vmatpush1.bf16.msra.mxu0 %v802
        %872 = vmatprep.subr.bf16.mxu0 0
        %873 = vmatpush1.bf16.msra.mxu0 %v803
        %874 = vmatprep.subr.bf16.mxu0 0
        %875 = vmatpush1.bf16.msra.mxu0 %v804
        %876 = vmatprep.subr.bf16.mxu0 0
        %877 = vmatpush1.bf16.msra.mxu0 %v805
        %878 = vmatprep.subr.bf16.mxu0 0
        %879 = vmatpush1.bf16.msra.mxu0 %v806
        %880 = vmatprep.subr.bf16.mxu0 0
        %881 = vmatpush1.bf16.msra.mxu0 %v807
        %882 = vmatprep.subr.bf16.mxu0 0
        %883 = vmatpush1.bf16.msra.mxu0 %v808
        %884 = vmatprep.subr.bf16.mxu0 0
        %885 = vmatpush1.bf16.msra.mxu0 %v809
        %886 = vmatprep.subr.bf16.mxu0 0
        %887 = vmatpush1.bf16.msra.mxu0 %v810
        %888 = vmatprep.subr.bf16.mxu0 0
        %889 = vmatpush1.bf16.msra.mxu0 %v811
        %890 = vmatprep.subr.bf16.mxu0 0
        %891 = vmatpush1.bf16.msra.mxu0 %v812
        %892 = vmatprep.subr.bf16.mxu0 0
        %893 = vmatpush1.bf16.msra.mxu0 %v813
        %894 = vmatprep.mubr.bf16.mxu0 %v596
        %895 = vmatmul.mubr.bf16.gmra.mrb[0].mxu0 %v595
        %v896 = vpop.f32.mrb[0].mxu0
        %v897 = vadd.f32 %v668, %v896
        %v898 = vpop.f32.mrb[0].mxu0
        %v899 = vpop.f32.mrb[0].mxu0
        %v900 = vpop.f32.mrb[0].mxu0
        %901 = vdwg.mxu0
        %902 = vmatprep.subr.bf16.mxu0 0
        %903 = vmatpush1.bf16.msra.mxu0 %v814
        %904 = vmatprep.subr.bf16.mxu0 0
        %905 = vmatpush1.bf16.msra.mxu0 %v815
        %906 = vmatprep.subr.bf16.mxu0 0
        %907 = vmatpush1.bf16.msra.mxu0 %v816
        %908 = vmatprep.subr.bf16.mxu0 0
        %909 = vmatpush1.bf16.msra.mxu0 %v817
        %910 = vmatprep.subr.bf16.mxu0 0
        %911 = vmatpush1.bf16.msra.mxu0 %v818
        %912 = vmatprep.subr.bf16.mxu0 0
        %913 = vmatpush1.bf16.msra.mxu0 %v819
        %914 = vmatprep.subr.bf16.mxu0 0
        %915 = vmatpush1.bf16.msra.mxu0 %v820
        %916 = vmatprep.subr.bf16.mxu0 0
        %917 = vmatpush1.bf16.msra.mxu0 %v821
        %918 = vmatprep.subr.bf16.mxu0 0
        %919 = vmatpush1.bf16.msra.mxu0 %v822
        %920 = vmatprep.subr.bf16.mxu0 0
        %921 = vmatpush1.bf16.msra.mxu0 %v823
        %922 = vmatprep.subr.bf16.mxu0 0
        %923 = vmatpush1.bf16.msra.mxu0 %v824
        %924 = vmatprep.subr.bf16.mxu0 0
        %925 = vmatpush1.bf16.msra.mxu0 %v825
        %926 = vmatprep.subr.bf16.mxu0 0
        %927 = vmatpush1.bf16.msra.mxu0 %v826
        %928 = vmatprep.subr.bf16.mxu0 0
        %929 = vmatpush1.bf16.msra.mxu0 %v827
        %930 = vmatprep.subr.bf16.mxu0 0
        %931 = vmatpush1.bf16.msra.mxu0 %v828
        %932 = vmatprep.subr.bf16.mxu0 0
        %933 = vmatpush1.bf16.msra.mxu0 %v829
        %934 = vmatprep.mubr.bf16.mxu0 %v598
        %935 = vmatmul.mubr.bf16.gmra.mrb[0].mxu0 %v597
        %v936 = vpop.f32.mrb[0].mxu0
        %v937 = vadd.f32 %v897, %v936
        %v938 = vpop.f32.mrb[0].mxu0
        %v939 = vpop.f32.mrb[0].mxu0
        %v940 = vpop.f32.mrb[0].mxu0
        %941 = vdwg.mxu0
        %v942 = vadd.f32 %v225, %v937
        %943 = vst [vmem:[%s215] sm:$0xff] %v942
        %s944 = sand.u32 %s137, 1
        %s945 = scalar_lea.sflag [#allocation3], %s944
        %s946 = sand.u32 %s137, 1
        %s947 = smul.addr %s946, 8
        %s948 = scalar_lea.vmem [#allocation2], %s947
        // Predicated region
        $region41: #{classifier_forward.1} parent=39 // pred_check
          %p949 = pneg %p147
        $region42: #{classifier_forward.1} parent=39 // pred_check_branch
          %951 = sbr.rel (%p949) target = $region44
        $region43: #{classifier_forward.1} parent=39 // pred_region
          %s953 = ssub.s32 128, 128
          %954 = vsyncadd %s945, %s953
          %s955 = smul.addr %s19, 128
          %s956 = scalar_lea.hbm %s5, %s955
          %s958 = sshll.u32 %s948, 4
          %s959 = int_to_ptr.vmem [resolvable:$true] %s958
          %961 = dma.vmem_to_hbm [thread:$0]  %s959, 128, %s956, %s945
        $region44: #{classifier_forward.1} parent=39 // pred_fallthru
          _
      $region40: #{classifier_forward.1} parent=5 // pred_fallthru
        _
      %p962 = scmp.le.s32.totalorder 2, %s14
      // Predicated region
      $region45: #{classifier_forward.1} parent=5 // pred_check
        %p963 = pneg %p962
      $region46: #{classifier_forward.1} parent=5 // pred_check_branch
        %965 = sbr.rel (%p963) target = $region48
      $region47: #{classifier_forward.1} parent=5 // pred_region
        %s966 = ssub.s32 %s14, 2
        // Predicated region
        $region49: #{classifier_forward.1} parent=47 // pred_check
          %p967 = pneg %p153
        $region50: #{classifier_forward.1} parent=47 // pred_check_branch
          %969 = sbr.rel (%p967) target = $region52
        $region51: #{classifier_forward.1} parent=47 // pred_region
          %s970 = sand.u32 %s138, 1
          %s971 = scalar_lea.sflag [#allocation3], %s970
          %s972 = sand.u32 %s138, 1
          %s973 = smul.addr %s972, 8
          %s974 = scalar_lea.vmem [#allocation2], %s973
          %975 = dma.done %s971, 128
        $region52: #{classifier_forward.1} parent=47 // pred_fallthru
          _
      $region48: #{classifier_forward.1} parent=5 // pred_fallthru
        _
    $region6: #{classifier_forward.1} parent=1 // loop_footer
      %s18 = sadd.s32 1, %s14
    $region7: #{classifier_forward.1} parent=1 // loop_footer_branch
      %13 = sbr.rel target = $region3
    $region8: #{classifier_forward.1} parent=1 // loop_exit
      _
    %976 = vsyncpa [#allocation3], 1
    %s977 = scalar_lea.sflag [#allocation3], 1
    %978 = vsyncpa %s977, 1

</llo_original>
